<compile_context>
chip_gen: v7x
topology: tpu7x:2x2x1
jax: 0.10.0
libtpu: 0.0.40
codegen_flags: <defaults>
</compile_context>

<pallas_src>
import numpy as np

import jax
import jax.numpy as jnp
from jax import lax
from jax.experimental import pallas as pl
from jax.experimental.pallas import tpu as pltpu

BN_EPS = 1e-5


def _round_up(x, m):
    return (x + m - 1) // m * m


# ----------------------------------------------------------------------------
# Host-side (numpy) builders for the folded upsample/conv structure matrices.
# ----------------------------------------------------------------------------
def _build_lerp_matrix(n_in):
    """(2*n_in, n_in) bilinear x2 matrix, PyTorch align_corners=False semantics."""
    n_out = 2 * n_in
    m = np.zeros((n_out, n_in), np.float32)
    for o in range(n_out):
        src = max((o + 0.5) / 2.0 - 0.5, 0.0)      # half-pixel, clamp negatives
        lo = min(int(np.floor(src)), n_in - 1)
        hi = min(lo + 1, n_in - 1)
        f = src - lo
        m[o, lo] += 1.0 - f
        m[o, hi] += f
    return m


def _build_row_matrices(H, tile_hi, tb_pad):
    """A: (NB, 3*THO, TB_pad).

    Row ky*THO + r of block rb maps the low-res band (padded rows
    [rb*tile_hi, rb*tile_hi + TB_pad)) onto the hi-res row needed by conv tap
    ky for output row rb*THO + r.  Conv zero-padding at the top/bottom of the
    hi-res image is encoded as all-zero rows; columns >= tile_hi+2 are zero
    (they only touch the extra zero-padded band rows).
    """
    NB = H // tile_hi
    THO = 2 * tile_hi
    ah = _build_lerp_matrix(H)                      # (2H, H)
    A = np.zeros((NB, 3 * THO, tb_pad), np.float32)
    for rb in range(NB):
        base_pad = rb * tile_hi                     # padded-row index of band start
        for ky in range(3):
            for r in range(THO):
                rho = rb * THO + r + ky - 1         # hi-res row (conv tap ky)
                if rho < 0 or rho >= 2 * H:
                    continue                        # conv zero-pad row
                for i in range(H):
                    wgt = ah[rho, i]
                    if wgt == 0.0:
                        continue
                    t = (i + 1) - base_pad          # original row i lives at padded row i+1
                    assert 0 <= t < tile_hi + 2 <= tb_pad
                    A[rb, ky * THO + r, t] += wgt
    return A


def _build_col_tap_matrices(W):
    """awp: (3, 2W, W).  awp[kx, o, j] = weight of low-res col j on the hi-res
    (conv-padded) column o + kx - 1 used by conv tap kx for output column o."""
    aw = _build_lerp_matrix(W)                      # (2W, W)
    awp = np.zeros((3, 2 * W, W), np.float32)
    for kx in range(3):
        for o in range(2 * W):
            col = o + kx - 1
            if 0 <= col < 2 * W:
                awp[kx, o, :] = aw[col]
    return awp


# ----------------------------------------------------------------------------
# Pallas kernel: fused bilinear x2 upsample + conv3x3 + BN + ReLU.
# One grid step = THO output rows x TILE_N output columns of one batch element.
# ----------------------------------------------------------------------------
def _fused_upconv_kernel(x_ref, a_ref, b_ref, shift_ref, o_ref, acc_ref):
    # x_ref:     (1, Hp, W*Cin)       zero-padded low-res image (one batch elem)
    # a_ref:     (1, 3*THO, TB_pad)   per-row-block H-upsample x ky-tap fold matrix
    # b_ref:     (3, W*Cin, TILE_N)   W-upsample x kx-tap x (conv weight * BN scale)
    # shift_ref: (1, TILE_N)          BN shift tiled over output columns (f32)
    # o_ref:     (1, THO, TILE_N)     one block of output rows (lane-dense)
    # acc_ref:   (THO, TILE_N) f32    VMEM accumulator scratch
    rb = pl.program_id(2)
    tb_pad = a_ref.shape[2]
    tho = o_ref.shape[1]
    tile_hi = tho // 2

    row0 = pl.multiple_of(rb * tile_hi, tile_hi)
    band = x_ref[0, pl.ds(row0, tb_pad), :]                      # (TB_pad, W*Cin)

    # H-axis: bilinear upsample + ky tap shift + top/bottom conv zero-pad,
    # one 8-sublane-aligned matmul.
    uh = jnp.dot(a_ref[0], band, preferred_element_type=jnp.float32)
    uh = uh.astype(b_ref.dtype)                                  # (3*THO, W*Cin)

    # W-axis upsample + kx taps + Cin->Cout mixing + BN scale: one matmul per ky,
    # accumulated into a VMEM f32 scratch (static loop -> unrolled).
    acc_ref[...] = jnp.dot(uh[0:tho, :], b_ref[0],
                           preferred_element_type=jnp.float32)
    for ky in range(1, 3):
        acc_ref[...] += jnp.dot(uh[ky * tho:(ky + 1) * tho, :], b_ref[ky],
                                preferred_element_type=jnp.float32)

    # BN shift + ReLU (shift ride on the VPU; work is tiny vs. the matmuls).
    o_ref[0] = jnp.maximum(acc_ref[...] + shift_ref[0, :], 0.0).astype(o_ref.dtype)


# ----------------------------------------------------------------------------
# upconv forward.  Input is NCHW (matching the PyTorch module); output defaults
# to NHWC to avoid a full HBM round-trip transposing the 4x-larger result.
# ----------------------------------------------------------------------------
def upconv_forward(x_nchw, w_oihw, gamma, beta, run_mean, run_var,
                   *, tile_hi=None, tile_n=None,
                   compute_dtype=jnp.float32, out_dtype=None,
                   output_layout="NHWC", vmem_limit_bytes=None):
    B, Cin, H, W = x_nchw.shape
    Cout = w_oihw.shape[0]
    assert w_oihw.shape == (Cout, Cin, 3, 3)

    if tile_hi is None:
        # Whole image per grid step while the matmul M (= 2*tile_hi) stays <=128;
        # larger images are row-blocked.
        tile_hi = H
        if 2 * H > 128:
            for cand in (64, 32, 16, 8):
                if H % cand == 0:
                    tile_hi = cand
                    break
    assert H % tile_hi == 0 and tile_hi >= 1
    NB = H // tile_hi
    THO = 2 * tile_hi
    TB = tile_hi + 2
    TB_pad = _round_up(TB, 8)          # 8-sublane-aligned row band
    extra = TB_pad - TB
    Hp = H + 2 + extra                 # padded low-res rows DMA'd per batch elem
    Wo = 2 * W
    N = Wo * Cout                      # lane-dense output width

    if tile_n is None:
        tile_n = N
    assert N % tile_n == 0
    if tile_n != N:
        assert tile_n % 128 == 0, "N tiles must be lane-aligned (multiple of 128)"
    NN = N // tile_n

    if out_dtype is None:
        out_dtype = compute_dtype

    # Fold BN (eval mode) into per-channel scale/shift; scale goes into the weights.
    # (For tighter bf16 accuracy keep bmat in f32 and cast only activations.)
    scale = gamma / jnp.sqrt(run_var + BN_EPS)
    shift = beta - run_mean * scale

    # Host-built structure matrices (depend only on static shapes).
    a_np = _build_row_matrices(H, tile_hi, TB_pad)     # (NB, 3*THO, TB_pad)
    awp_np = _build_col_tap_matrices(W)                # (3, 2W, W)

    # Bmat[ky, j*Cin+c, o*Cout+co] = sum_kx awp[kx,o,j] * w[co,c,ky,kx] * scale[co]
    bmat = jnp.einsum('xoj,ucyx,u->yjcou', jnp.asarray(awp_np), w_oihw, scale,
                      precision=lax.Precision.HIGHEST)
    bmat = bmat.reshape(3, W * Cin, N)

    # Input: NCHW -> NHWC -> zero-pad H (1 top, 1+extra bottom) -> (Hp, W*Cin).
    # (This transpose touches only the low-res input, 4x smaller than the output.)
    x_nhwc = jnp.transpose(x_nchw, (0, 2, 3, 1))
    xp = jnp.pad(x_nhwc, ((0, 0), (1, 1 + extra), (0, 0), (0, 0)))
    xp2 = xp.reshape(B, Hp, W * Cin).astype(compute_dtype)

    a_mat = jnp.asarray(a_np, dtype=compute_dtype)
    bmat = bmat.astype(compute_dtype)
    shift_t = jnp.tile(shift, Wo).reshape(1, N).astype(jnp.float32)

    # Advisory cost estimate so XLA schedules neighbours around the custom call.
    isz = np.dtype(compute_dtype).itemsize
    osz = np.dtype(out_dtype).itemsize
    flops = B * NN * NB * (2 * (3 * THO) * TB_pad * (W * Cin)
                           + 3 * 2 * THO * (W * Cin) * tile_n)
    bytes_accessed = (B * Hp * W * Cin * isz          # x
                      + NB * 3 * THO * TB_pad * isz   # A
                      + 3 * W * Cin * N * isz         # folded weights
                      + N * 4                         # shift
                      + B * 2 * H * N * osz)          # output
    cost = pl.CostEstimate(flops=int(flops), transcendentals=0,
                           bytes_accessed=int(bytes_accessed))

    out2d = pl.pallas_call(
        _fused_upconv_kernel,
        out_shape=jax.ShapeDtypeStruct((B, 2 * H, N), out_dtype),
        grid=(B, NN, NB),                              # all axes independent
        in_specs=[
            # whole padded low-res image for this batch element (resident over n, rb)
            pl.BlockSpec((1, Hp, W * Cin), lambda b, n, rb: (b, 0, 0)),
            pl.BlockSpec((1, 3 * THO, TB_pad), lambda b, n, rb: (rb, 0, 0)),
            pl.BlockSpec((3, W * Cin, tile_n), lambda b, n, rb: (0, 0, n)),
            pl.BlockSpec((1, tile_n), lambda b, n, rb: (0, n)),
        ],
        out_specs=pl.BlockSpec((1, THO, tile_n), lambda b, n, rb: (b, rb, n)),
        scratch_shapes=[pltpu.VMEM((THO, tile_n), jnp.float32)],
        compiler_params=pltpu.CompilerParams(
            dimension_semantics=("parallel", "parallel", "parallel"),
            vmem_limit_bytes=vmem_limit_bytes),
        cost_estimate=cost,
    )(xp2, a_mat, bmat, shift_t)

    out = out2d.reshape(B, 2 * H, Wo, Cout)            # NHWC, pure reshape (free)
    if output_layout == "NCHW":                        # opt-in PyTorch layout parity
        out = jnp.transpose(out, (0, 3, 1, 2))
    return out


# ----------------------------------------------------------------------------
# Independent reference: jax.image.resize (half-pixel bilinear == PyTorch
# align_corners=False for x2 upsampling) + XLA conv + BN + ReLU, NCHW.
# ----------------------------------------------------------------------------
def _reference_forward(x_nchw, w_oihw, gamma, beta, run_mean, run_var):
    B, C, H, W = x_nchw.shape
    up = jax.image.resize(x_nchw, (B, C, 2 * H, 2 * W), method="bilinear")
    conv = lax.conv_general_dilated(
        up, w_oihw, window_strides=(1, 1), padding=((1, 1), (1, 1)),
        dimension_numbers=("NCHW", "OIHW", "NCHW"),
        precision=lax.Precision.HIGHEST)
    scale = gamma / jnp.sqrt(run_var + BN_EPS)
    shift = beta - run_mean * scale
    y = conv * scale[None, :, None, None] + shift[None, :, None, None]
    return jnp.maximum(y, 0.0)


if __name__ == "__main__":
    # upconv in DepthDecoder has in_channels == out_channels; small test shape.
    B, Cin, H, W = 2, 8, 16, 16
    Cout = 8

    key = jax.random.PRNGKey(0)
    k1, k2, k3, k4, k5, k6 = jax.random.split(key, 6)
    x = jax.random.normal(k1, (B, Cin, H, W), jnp.float32)
    w = 0.1 * jax.random.normal(k2, (Cout, Cin, 3, 3), jnp.float32)   # OIHW
    gamma = 1.0 + 0.1 * jax.random.normal(k3, (Cout,), jnp.float32)
    beta = 0.1 * jax.random.normal(k4, (Cout,), jnp.float32)
    run_mean = 0.1 * jax.random.normal(k5, (Cout,), jnp.float32)
    run_var = 1.0 + 0.1 * jax.random.uniform(k6, (Cout,), jnp.float32)

    ref_nchw = jax.block_until_ready(
        _reference_forward(x, w, gamma, beta, run_mean, run_var))
    ref_nhwc = np.transpose(np.asarray(ref_nchw), (0, 2, 3, 1))

    # f32 path, NHWC output (default; no wrapper transpose of the 4x-sized output).
    out = jax.block_until_ready(
        upconv_forward(x, w, gamma, beta, run_mean, run_var))
    assert out.shape == (B, 2 * H, 2 * W, Cout), out.shape
    np.testing.assert_allclose(np.asarray(out), ref_nhwc, rtol=1e-2, atol=1e-2)

    # NCHW output option: exact layout parity with the PyTorch module.
    out_nchw = jax.block_until_ready(
        upconv_forward(x, w, gamma, beta, run_mean, run_var,
                       output_layout="NCHW"))
    np.testing.assert_allclose(np.asarray(out_nchw), np.asarray(ref_nchw),
                               rtol=1e-2, atol=1e-2)

    # Row-blocked + N-tiled path (exercises rb > 0 bands and the N grid axis,
    # the configuration used for larger production stages).
    out_tiled = jax.block_until_ready(
        upconv_forward(x, w, gamma, beta, run_mean, run_var,
                       tile_hi=8, tile_n=128))
    np.testing.assert_allclose(np.asarray(out_tiled), ref_nhwc,
                               rtol=1e-2, atol=1e-2)

    # bf16 MXU-operand + bf16-output path (f32 accumulation) — v6e/v7x friendly,
    # halves the dominant HBM output stream.
    out_bf16 = jax.block_until_ready(
        upconv_forward(x, w, gamma, beta, run_mean, run_var,
                       compute_dtype=jnp.bfloat16))
    np.testing.assert_allclose(np.asarray(out_bf16).astype(np.float32), ref_nhwc,
                               rtol=5e-2, atol=5e-2)

    print("KERNEL_OK")
</pallas_src>

<mosaic_0001>
module attributes {stable_mosaic.version = 11 : i64} {
  func.func @_fused_upconv_kernel(%arg0: i32, %arg1: i32, %arg2: i32, %arg3: memref<1x24x128xf32, #tpu.memory_space<vmem>>, %arg4: memref<1x96x24xf32, #tpu.memory_space<vmem>>, %arg5: memref<3x128x256xf32, #tpu.memory_space<vmem>>, %arg6: memref<1x256xf32, #tpu.memory_space<vmem>>, %arg7: memref<1x32x256xf32, #tpu.memory_space<vmem>>, %arg8: memref<32x256xf32, #tpu.memory_space<vmem>>) attributes {dimension_semantics = [#tpu.dimension_semantics<parallel>, #tpu.dimension_semantics<parallel>, #tpu.dimension_semantics<parallel>], iteration_bounds = array<i64: 2, 1, 1>, scalar_prefetch = 0 : i64, scratch_operands = 1 : i64, tpu.core_type = #tpu.core_type<tc>, window_params = [{transform_indices = @transform_0, window_bounds = array<i64: 1, 24, 128>}, {transform_indices = @transform_1, window_bounds = array<i64: 1, 96, 24>}, {transform_indices = @transform_2, window_bounds = array<i64: 3, 128, 256>}, {transform_indices = @transform_3, window_bounds = array<i64: 1, 256>}, {transform_indices = @transform_4, window_bounds = array<i64: 1, 32, 256>}]} {
    %c16_i32 = arith.constant 16 : i32
    %0 = arith.muli %arg2, %c16_i32 : i32
    %1 = tpu.assume_multiple %0, 16 : i32
    %c0 = arith.constant 0 : index
    %2 = arith.index_cast %1 : i32 to index
    %c0_0 = arith.constant 0 : index
    %3 = vector.load %arg3[%c0, %2, %c0_0] : memref<1x24x128xf32, #tpu.memory_space<vmem>>, vector<1x24x128xf32>
    %4 = vector.shape_cast %3 : vector<1x24x128xf32> to vector<24x128xf32>
    %c0_1 = arith.constant 0 : index
    %c0_2 = arith.constant 0 : index
    %c0_3 = arith.constant 0 : index
    %5 = vector.load %arg4[%c0_1, %c0_2, %c0_3] : memref<1x96x24xf32, #tpu.memory_space<vmem>>, vector<1x96x24xf32>
    %6 = vector.shape_cast %5 : vector<1x96x24xf32> to vector<96x24xf32>
    %cst = arith.constant dense<0.000000e+00> : vector<96x128xf32>
    %7 = tpu.matmul %6, %4, %cst {dimension_numbers = #tpu.dot_dimension_numbers<[1], [0], [0], [1], [0, 0, 1, 1], [], []>} : vector<96x24xf32>, vector<24x128xf32>, vector<96x128xf32> -> vector<96x128xf32>
    %8 = vector.extract_strided_slice %7 {offsets = [0, 0], sizes = [32, 128], strides = [1, 1]} : vector<96x128xf32> to vector<32x128xf32>
    %c0_4 = arith.constant 0 : index
    %c0_5 = arith.constant 0 : index
    %c0_6 = arith.constant 0 : index
    %9 = vector.load %arg5[%c0_4, %c0_5, %c0_6] : memref<3x128x256xf32, #tpu.memory_space<vmem>>, vector<1x128x256xf32>
    %10 = vector.shape_cast %9 : vector<1x128x256xf32> to vector<128x256xf32>
    %cst_7 = arith.constant dense<0.000000e+00> : vector<32x256xf32>
    %11 = tpu.matmul %8, %10, %cst_7 {dimension_numbers = #tpu.dot_dimension_numbers<[1], [0], [0], [1], [0, 0, 1, 1], [], []>} : vector<32x128xf32>, vector<128x256xf32>, vector<32x256xf32> -> vector<32x256xf32>
    %c0_8 = arith.constant 0 : index
    %c0_9 = arith.constant 0 : index
    %12 = vector.load %arg8[%c0_8, %c0_9] : memref<32x256xf32, #tpu.memory_space<vmem>>, vector<32x256xf32>
    tpu.vector_store %arg8[%c0_8, %c0_9], %11 {strides = array<i32>} : memref<32x256xf32, #tpu.memory_space<vmem>>, vector<32x256xf32>,
    %c0_10 = arith.constant 0 : index
    %c0_11 = arith.constant 0 : index
    %13 = vector.load %arg8[%c0_10, %c0_11] : memref<32x256xf32, #tpu.memory_space<vmem>>, vector<32x256xf32>
    %14 = vector.extract_strided_slice %7 {offsets = [32, 0], sizes = [32, 128], strides = [1, 1]} : vector<96x128xf32> to vector<32x128xf32>
    %c1 = arith.constant 1 : index
    %c0_12 = arith.constant 0 : index
    %c0_13 = arith.constant 0 : index
    %15 = vector.load %arg5[%c1, %c0_12, %c0_13] : memref<3x128x256xf32, #tpu.memory_space<vmem>>, vector<1x128x256xf32>
    %16 = vector.shape_cast %15 : vector<1x128x256xf32> to vector<128x256xf32>
    %cst_14 = arith.constant dense<0.000000e+00> : vector<32x256xf32>
    %17 = tpu.matmul %14, %16, %cst_14 {dimension_numbers = #tpu.dot_dimension_numbers<[1], [0], [0], [1], [0, 0, 1, 1], [], []>} : vector<32x128xf32>, vector<128x256xf32>, vector<32x256xf32> -> vector<32x256xf32>
    %18 = arith.addf %13, %17 : vector<32x256xf32>
    %c0_15 = arith.constant 0 : index
    %c0_16 = arith.constant 0 : index
    %19 = vector.load %arg8[%c0_15, %c0_16] : memref<32x256xf32, #tpu.memory_space<vmem>>, vector<32x256xf32>
    tpu.vector_store %arg8[%c0_15, %c0_16], %18 {strides = array<i32>} : memref<32x256xf32, #tpu.memory_space<vmem>>, vector<32x256xf32>,
    %c0_17 = arith.constant 0 : index
    %c0_18 = arith.constant 0 : index
    %20 = vector.load %arg8[%c0_17, %c0_18] : memref<32x256xf32, #tpu.memory_space<vmem>>, vector<32x256xf32>
    %21 = vector.extract_strided_slice %7 {offsets = [64, 0], sizes = [32, 128], strides = [1, 1]} : vector<96x128xf32> to vector<32x128xf32>
    %c2 = arith.constant 2 : index
    %c0_19 = arith.constant 0 : index
    %c0_20 = arith.constant 0 : index
    %22 = vector.load %arg5[%c2, %c0_19, %c0_20] : memref<3x128x256xf32, #tpu.memory_space<vmem>>, vector<1x128x256xf32>
    %23 = vector.shape_cast %22 : vector<1x128x256xf32> to vector<128x256xf32>
    %cst_21 = arith.constant dense<0.000000e+00> : vector<32x256xf32>
    %24 = tpu.matmul %21, %23, %cst_21 {dimension_numbers = #tpu.dot_dimension_numbers<[1], [0], [0], [1], [0, 0, 1, 1], [], []>} : vector<32x128xf32>, vector<128x256xf32>, vector<32x256xf32> -> vector<32x256xf32>
    %25 = arith.addf %20, %24 : vector<32x256xf32>
    %c0_22 = arith.constant 0 : index
    %c0_23 = arith.constant 0 : index
    %26 = vector.load %arg8[%c0_22, %c0_23] : memref<32x256xf32, #tpu.memory_space<vmem>>, vector<32x256xf32>
    tpu.vector_store %arg8[%c0_22, %c0_23], %25 {strides = array<i32>} : memref<32x256xf32, #tpu.memory_space<vmem>>, vector<32x256xf32>,
    %c0_24 = arith.constant 0 : index
    %c0_25 = arith.constant 0 : index
    %27 = vector.load %arg8[%c0_24, %c0_25] : memref<32x256xf32, #tpu.memory_space<vmem>>, vector<32x256xf32>
    %c0_26 = arith.constant 0 : index
    %c0_27 = arith.constant 0 : index
    %28 = vector.load %arg6[%c0_26, %c0_27] : memref<1x256xf32, #tpu.memory_space<vmem>>, vector<1x256xf32>
    %29 = vector.shape_cast %28 : vector<1x256xf32> to vector<256xf32>
    %30 = vector.shape_cast %29 : vector<256xf32> to vector<1x256xf32>
    %31 = vector.broadcast %30 : vector<1x256xf32> to vector<32x256xf32>
    %32 = arith.addf %27, %31 : vector<32x256xf32>
    %cst_28 = arith.constant 0.000000e+00 : f32
    %33 = vector.broadcast %cst_28 : f32 to vector<32x256xf32>
    %34 = arith.maximumf %32, %33 : vector<32x256xf32>
    %c0_29 = arith.constant 0 : index
    %c0_30 = arith.constant 0 : index
    %c0_31 = arith.constant 0 : index
    %35 = vector.load %arg7[%c0_29, %c0_30, %c0_31] : memref<1x32x256xf32, #tpu.memory_space<vmem>>, vector<1x32x256xf32>
    %36 = vector.shape_cast %35 : vector<1x32x256xf32> to vector<32x256xf32>
    %37 = vector.shape_cast %34 : vector<32x256xf32> to vector<1x32x256xf32>
    tpu.vector_store %arg7[%c0_29, %c0_30, %c0_31], %37 {strides = array<i32>} : memref<1x32x256xf32, #tpu.memory_space<vmem>>, vector<1x32x256xf32>,
    return
  }
  func.func @transform_0(%arg0: i32, %arg1: i32, %arg2: i32) -> (i32, i32, i32) {
    %c0_i32 = arith.constant 0 : i32
    %c0_i32_0 = arith.constant 0 : i32
    %c0_i32_1 = arith.constant 0 : i32
    return %arg0, %c0_i32, %c0_i32_0 : i32, i32, i32
  }
  func.func @transform_1(%arg0: i32, %arg1: i32, %arg2: i32) -> (i32, i32, i32) {
    %c0_i32 = arith.constant 0 : i32
    %c0_i32_0 = arith.constant 0 : i32
    %c0_i32_1 = arith.constant 0 : i32
    return %arg2, %c0_i32, %c0_i32_0 : i32, i32, i32
  }
  func.func @transform_2(%arg0: i32, %arg1: i32, %arg2: i32) -> (i32, i32, i32) {
    %c0_i32 = arith.constant 0 : i32
    %c0_i32_0 = arith.constant 0 : i32
    %c0_i32_1 = arith.constant 0 : i32
    return %c0_i32, %c0_i32_0, %arg1 : i32, i32, i32
  }
  func.func @transform_3(%arg0: i32, %arg1: i32, %arg2: i32) -> (i32, i32) {
    %c0_i32 = arith.constant 0 : i32
    %c0_i32_0 = arith.constant 0 : i32
    return %c0_i32, %arg1 : i32, i32
  }
  func.func @transform_4(%arg0: i32, %arg1: i32, %arg2: i32) -> (i32, i32, i32) {
    %c0_i32 = arith.constant 0 : i32
    return %arg0, %arg2, %arg1 : i32, i32, i32
  }
}

</mosaic_0001>

<llo_original>
// kernel: tpu_custom_call.1
$region0: #{tpu_custom_call.1}
  #allocation0 [shape = 'u32[]', space=smem, size = 0x4, offset = 0x4, fixed_abs, tag = 'smem constant byte address 0x4 - core index']
  #allocation1 [shape = 'u32[144,128]{1,0:T(1,128)}', space=vmem, size = 0x12000, scoped, tag = 'internal scratch']
  #allocation2 [shape = 'f32[32,256]{1,0:T(8,128)}', space=vmem, size = 0x8000, scoped, tag = 'scratch operand']
  %s0 = inlined_call_operand.vmem [shape: f32[2,24,128], index: 0, kind: input, shape index: {}]
  %s1 = inlined_call_operand.vmem [shape: f32[1,96,24], index: 1, kind: input, shape index: {}]
  %s2 = inlined_call_operand.hbm [shape: f32[3,128,256], index: 2, kind: input, shape index: {}]
  %s3 = inlined_call_operand.vmem [shape: f32[1,256], index: 3, kind: input, shape index: {}]
  %s4 = inlined_call_operand.hbm [shape: f32[2,32,256], index: 4, kind: output, shape index: {}]
  %s5 = sld [smem:[#allocation0]]
  $region53: #{tpu_custom_call.1} parent=0
    _
  %s7 = ssub.s32 1, %s5
  %s8 = scalar_select 0, %s7, %s5
  $region1: #{tpu_custom_call.1} parent=0
    #allocation3 [shape = 'u8[393216]{0}', space=vmem, size = 0x60000, scoped, tag = 'input window, operand 2, single buffered']
    #allocation4 [shape = 's32[2]{0}', space=sflag, size = 0x8, scoped, tag = 'scoped memory for tpu_custom_call.1']
    #allocation5 [shape = 's32[2]{0}', space=sflag, size = 0x8, scoped, tag = 'scoped memory for tpu_custom_call.1']
    #allocation6 [shape = 'u8[65536]{0}', space=vmem, size = 0x10000, scoped, tag = 'output window, operand 0']
    %9 = vsyncpa [#allocation4], 0
    %10 = vsyncpa [#allocation5], 0
    %s11 = scalar_lea.sflag [#allocation5], 1
    %12 = vsyncpa %s11, 0
    loop: start=0, step=1, limit=4
    $region2: #{tpu_custom_call.1} parent=1 // loop_pre_header
      _
    $region3: #{tpu_custom_call.1} parent=1 // loop_header
      %s14 = sphi 0, %s18
      %p15 = scmp.ge.s32.totalorder %s14, 4
      %s21 = sphi 0, %s40
      %s22 = sphi 0, %s36
      %s23 = sphi 0, %s32
      %s24 = sphi 0, %s21
      %s25 = sphi 0, %s22
      %s26 = sphi 0, %s23
      %s27 = sphi 0, %s24
      %s28 = sphi 0, %s25
      %s29 = sphi 0, %s26
      %s43 = sphi 0, %s45
      %s46 = sphi 0, %s43
      %s47 = sphi 0, %s46
      %s63 = sphi 0, %s47
      %s69 = sphi 0, %s71
      %s72 = sphi 0, %s69
      %s73 = sphi 0, %s72
      %s89 = sphi 0, %s73
      %s95 = sphi 0, %s97
      %s98 = sphi 0, %s95
      %s99 = sphi 0, %s98
      %s115 = sphi 0, %s99
      %s121 = sphi 0, %s123
      %s124 = sphi 0, %s121
      %s125 = sphi 0, %s124
      %s141 = sphi 0, %s125
      %s151 = sphi 0, %s153
      %s154 = sphi 0, %s151
      %s155 = sphi 0, %s154
      %s171 = sphi 0, %s155
    $region4: #{tpu_custom_call.1} parent=1 // loop_header_branch
      %17 = sbr.rel (%p15) target = $region8
    $region5: #{tpu_custom_call.1} parent=1 // loop_body
      %s19 = ssub.s32 %s14, 1
      %s20 = ssub.s32 %s14, 2
      %s30 = sadd.s32 1, %s23
      %p31 = scmp.ge.s32.totalorder %s30, 1
      %s32 = scalar_select %p31, 0, %s30
      %s33 = sadd.s32 1, %s22
      %s34 = scalar_select %p31, %s33, %s22
      %p35 = scmp.ge.s32.totalorder %s34, 1
      %s36 = scalar_select %p35, 0, %s34
      %s37 = sadd.s32 1, %s21
      %s38 = scalar_select %p35, %s37, %s21
      %p39 = scmp.ge.s32.totalorder %s38, 2
      %s40 = scalar_select %p39, 0, %s38
      %s41 = ssub.s32 %s21, %s40
      %p42 = scmp.eq.s32.totalorder %s41, 0
      %s44 = sadd.s32 %s43, 1
      %s45 = scalar_select %p42, %s43, %s44
      %p48 = pneg %p42
      %p49 = scmp.eq.s32.totalorder %s14, 1
      %p50 = por %p48, %p49
      %p51 = scmp.ne.s32.totalorder %s43, %s46
      %p52 = scmp.eq.s32.totalorder %s14, 0
      %p53 = por %p51, %p52
      %p54 = scmp.ne.s32.totalorder %s43, %s46
      %p55 = scmp.eq.s32.totalorder %s19, 1
      %p56 = por %p54, %p55
      %p57 = scmp.ne.s32.totalorder %s46, %s47
      %p58 = scmp.eq.s32.totalorder %s19, 0
      %p59 = por %p57, %p58
      %p60 = scmp.ne.s32.totalorder %s46, %s47
      %p61 = scmp.eq.s32.totalorder %s20, 1
      %p62 = por %p60, %p61
      %p64 = scmp.ne.s32.totalorder %s47, %s63
      %p65 = scmp.eq.s32.totalorder %s20, 0
      %p66 = por %p64, %p65
      %s67 = ssub.s32 %s23, %s32
      %p68 = scmp.eq.s32.totalorder %s67, 0
      %s70 = sadd.s32 %s69, 1
      %s71 = scalar_select %p68, %s69, %s70
      %p74 = pneg %p68
      %p75 = scmp.eq.s32.totalorder %s14, 1
      %p76 = por %p74, %p75
      %p77 = scmp.ne.s32.totalorder %s69, %s72
      %p78 = scmp.eq.s32.totalorder %s14, 0
      %p79 = por %p77, %p78
      %p80 = scmp.ne.s32.totalorder %s69, %s72
      %p81 = scmp.eq.s32.totalorder %s19, 1
      %p82 = por %p80, %p81
      %p83 = scmp.ne.s32.totalorder %s72, %s73
      %p84 = scmp.eq.s32.totalorder %s19, 0
      %p85 = por %p83, %p84
      %p86 = scmp.ne.s32.totalorder %s72, %s73
      %p87 = scmp.eq.s32.totalorder %s20, 1
      %p88 = por %p86, %p87
      %p90 = scmp.ne.s32.totalorder %s73, %s89
      %p91 = scmp.eq.s32.totalorder %s20, 0
      %p92 = por %p90, %p91
      %s93 = ssub.s32 %s22, %s36
      %p94 = scmp.eq.s32.totalorder %s93, 0
      %s96 = sadd.s32 %s95, 1
      %s97 = scalar_select %p94, %s95, %s96
      %p100 = pneg %p94
      %p101 = scmp.eq.s32.totalorder %s14, 1
      %p102 = por %p100, %p101
      %p103 = scmp.ne.s32.totalorder %s95, %s98
      %p104 = scmp.eq.s32.totalorder %s14, 0
      %p105 = por %p103, %p104
      %p106 = scmp.ne.s32.totalorder %s95, %s98
      %p107 = scmp.eq.s32.totalorder %s19, 1
      %p108 = por %p106, %p107
      %p109 = scmp.ne.s32.totalorder %s98, %s99
      %p110 = scmp.eq.s32.totalorder %s19, 0
      %p111 = por %p109, %p110
      %p112 = scmp.ne.s32.totalorder %s98, %s99
      %p113 = scmp.eq.s32.totalorder %s20, 1
      %p114 = por %p112, %p113
      %p116 = scmp.ne.s32.totalorder %s99, %s115
      %p117 = scmp.eq.s32.totalorder %s20, 0
      %p118 = por %p116, %p117
      %s119 = ssub.s32 %s22, %s36
      %p120 = scmp.eq.s32.totalorder %s119, 0
      %s122 = sadd.s32 %s121, 1
      %s123 = scalar_select %p120, %s121, %s122
      %p126 = pneg %p120
      %p127 = scmp.eq.s32.totalorder %s14, 1
      %p128 = por %p126, %p127
      %p129 = scmp.ne.s32.totalorder %s121, %s124
      %p130 = scmp.eq.s32.totalorder %s14, 0
      %p131 = por %p129, %p130
      %p132 = scmp.ne.s32.totalorder %s121, %s124
      %p133 = scmp.eq.s32.totalorder %s19, 1
      %p134 = por %p132, %p133
      %p135 = scmp.ne.s32.totalorder %s124, %s125
      %p136 = scmp.eq.s32.totalorder %s19, 0
      %p137 = por %p135, %p136
      %p138 = scmp.ne.s32.totalorder %s124, %s125
      %p139 = scmp.eq.s32.totalorder %s20, 1
      %p140 = por %p138, %p139
      %p142 = scmp.ne.s32.totalorder %s125, %s141
      %p143 = scmp.eq.s32.totalorder %s20, 0
      %p144 = por %p142, %p143
      %s145 = ssub.s32 %s21, %s40
      %s146 = ssub.s32 %s23, %s32
      %s147 = sor.u32 %s145, %s146
      %s148 = ssub.s32 %s22, %s36
      %s149 = sor.u32 %s147, %s148
      %p150 = scmp.eq.s32.totalorder %s149, 0
      %s152 = sadd.s32 %s151, 1
      %s153 = scalar_select %p150, %s151, %s152
      %p156 = pneg %p150
      %p157 = scmp.eq.s32.totalorder %s14, 1
      %p158 = por %p156, %p157
      %p159 = scmp.ne.s32.totalorder %s151, %s154
      %p160 = scmp.eq.s32.totalorder %s14, 0
      %p161 = por %p159, %p160
      %p162 = scmp.ne.s32.totalorder %s151, %s154
      %p163 = scmp.eq.s32.totalorder %s19, 1
      %p164 = por %p162, %p163
      %p165 = scmp.ne.s32.totalorder %s154, %s155
      %p166 = scmp.eq.s32.totalorder %s19, 0
      %p167 = por %p165, %p166
      %p168 = scmp.ne.s32.totalorder %s154, %s155
      %p169 = scmp.eq.s32.totalorder %s20, 1
      %p170 = por %p168, %p169
      %p172 = scmp.ne.s32.totalorder %s155, %s171
      %p173 = scmp.eq.s32.totalorder %s20, 0
      %p174 = por %p172, %p173
      %p175 = scmp.le.s32.totalorder 1, %s14
      %p176 = scmp.lt.s32.totalorder %s14, 3
      %p177 = pnand %p175, %p176
      %p178 = pneg %p177
      // Predicated region
      $region9: #{tpu_custom_call.1} parent=5 // pred_check
        _
      $region10: #{tpu_custom_call.1} parent=5 // pred_check_branch
        %180 = sbr.rel (%p177) target = $region12
      $region11: #{tpu_custom_call.1} parent=5 // pred_region
        %s181 = ssub.s32 %s14, 1
        // Predicated region
        $region13: #{tpu_custom_call.1} parent=11 // pred_check
          %p182 = pneg %p85
        $region14: #{tpu_custom_call.1} parent=11 // pred_check_branch
          %184 = sbr.rel (%p182) target = $region16
        $region15: #{tpu_custom_call.1} parent=11 // pred_region
          %p185 = scmp.lt.s32.totalorder %s26, 0
          %s186 = scalar_select %p185, %s26, 0
          %s187 = smul.addr %s186, 12
          %s188 = smul.addr %s187, 8
          %s189 = scalar_lea.vmem %s1, %s188
        $region16: #{tpu_custom_call.1} parent=11 // pred_fallthru
          _
        // Predicated region
        $region17: #{tpu_custom_call.1} parent=11 // pred_check
          %p190 = pneg %p111
        $region18: #{tpu_custom_call.1} parent=11 // pred_check_branch
          %192 = sbr.rel (%p190) target = $region20
        $region19: #{tpu_custom_call.1} parent=11 // pred_region
          %s193 = smul.u32 2, %s25
          %s195 = ssub.s32 12288, 12288
          %196 = vsyncadd [#allocation4], %s195
          %s197 = smul.addr %s193, 128
          %s198 = scalar_lea.hbm %s2, %s197
          %s199 = sshll.u32 [#allocation3], 4
          %s200 = int_to_ptr.vmem [resolvable:$true] %s199
          %205 = dma.hbm_to_vmem [thread:$0]  %s198, 12288, %s200, [#allocation4], 256, 256, 16
        $region20: #{tpu_custom_call.1} parent=11 // pred_fallthru
          _
        // Predicated region
        $region21: #{tpu_custom_call.1} parent=11 // pred_check
          %p206 = pneg %p137
        $region22: #{tpu_custom_call.1} parent=11 // pred_check_branch
          %208 = sbr.rel (%p206) target = $region24
        $region23: #{tpu_custom_call.1} parent=11 // pred_region
          %s209 = smul.u32 2, %s25
          %p210 = scmp.lt.s32.totalorder %s209, 1
          %s211 = scalar_select %p210, %s209, 1
          %s212 = scalar_lea.vmem %s3, %s211
          %s213 = smul.u32 2, %s25
        $region24: #{tpu_custom_call.1} parent=11 // pred_fallthru
          _
      $region12: #{tpu_custom_call.1} parent=5 // pred_fallthru
        _
      %p214 = scmp.lt.s32.totalorder %s14, 2
      // Predicated region
      $region25: #{tpu_custom_call.1} parent=5 // pred_check
        %p215 = pneg %p214
      $region26: #{tpu_custom_call.1} parent=5 // pred_check_branch
        %217 = sbr.rel (%p215) target = $region28
      $region27: #{tpu_custom_call.1} parent=5 // pred_region
        // Predicated region
        $region29: #{tpu_custom_call.1} parent=27 // pred_check
          %p218 = pneg %p53
        $region30: #{tpu_custom_call.1} parent=27 // pred_check_branch
          %220 = sbr.rel (%p218) target = $region32
        $region31: #{tpu_custom_call.1} parent=27 // pred_region
          %p221 = scmp.lt.s32.totalorder %s21, 1
          %s222 = scalar_select %p221, %s21, 1
          %s223 = smul.addr %s222, 3
          %s224 = smul.addr %s223, 8
          %s225 = scalar_lea.vmem %s0, %s224
        $region32: #{tpu_custom_call.1} parent=27 // pred_fallthru
          _
      $region28: #{tpu_custom_call.1} parent=5 // pred_fallthru
        _
      %p226 = scmp.le.s32.totalorder 1, %s14
      %p227 = scmp.lt.s32.totalorder %s14, 3
      %p228 = pnand %p226, %p227
      %p229 = pneg %p228
      // Predicated region
      $region33: #{tpu_custom_call.1} parent=5 // pred_check
        _
      $region34: #{tpu_custom_call.1} parent=5 // pred_check_branch
        %231 = sbr.rel (%p228) target = $region36
      $region35: #{tpu_custom_call.1} parent=5 // pred_region
        %s232 = ssub.s32 %s14, 1
        // Predicated region
        $region37: #{tpu_custom_call.1} parent=35 // pred_check
          %p233 = pneg %p111
        $region38: #{tpu_custom_call.1} parent=35 // pred_check_branch
          %235 = sbr.rel (%p233) target = $region40
        $region39: #{tpu_custom_call.1} parent=35 // pred_region
          %236 = dma.done [#allocation4], 12288
        $region40: #{tpu_custom_call.1} parent=35 // pred_fallthru
          _
        %p237 = scmp.lt.s32.totalorder %s24, 1
        %s238 = scalar_select %p237, %s24, 1
        %s239 = smul.addr %s238, 3
        %s240 = smul.addr %s239, 8
        %s241 = scalar_lea.vmem %s0, %s240
        %p242 = pneg %p59
        %p243 = pneg %p56
        %p244 = scmp.lt.s32.totalorder %s26, 0
        %s245 = scalar_select %p244, %s26, 0
        %s246 = smul.addr %s245, 12
        %s247 = smul.addr %s246, 8
        %s248 = scalar_lea.vmem %s1, %s247
        %p249 = pneg %p85
        %p250 = pneg %p82
        %p251 = pneg %p111
        %p252 = pneg %p108
        %s253 = smul.u32 2, %s25
        %p254 = scmp.lt.s32.totalorder %s253, 1
        %s255 = scalar_select %p254, %s253, 1
        %s256 = scalar_lea.vmem %s3, %s255
        %p257 = pneg %p137
        %p258 = pneg %p134
        %p259 = pneg %p167
        %p260 = pneg %p164
        %s261 = sand.u32 %s154, 1
        %s262 = scalar_lea.sflag [#allocation5], %s261
        %s263 = sand.u32 %s154, 1
        %s264 = smul.addr %s263, 64
        %s265 = scalar_lea.vmem [#allocation6], %s264
        %p266 = scmp.lt.s32.totalorder %s24, 1
        %s267 = scalar_select %p266, %s24, 1
        %s268 = smul.addr %s267, 3
        %s269 = smul.addr %s268, 8
        %s270 = scalar_lea.vmem %s0, %s269
        %p271 = scmp.lt.s32.totalorder %s26, 0
        %s272 = scalar_select %p271, %s26, 0
        %s273 = smul.addr %s272, 12
        %s274 = smul.addr %s273, 8
        %s275 = scalar_lea.vmem %s1, %s274
        %s276 = smul.u32 2, %s25
        %s277 = smul.u32 2, %s25
        %p278 = scmp.lt.s32.totalorder %s277, 1
        %s279 = scalar_select %p278, %s277, 1
        %s280 = scalar_lea.vmem %s3, %s279
        %s281 = smul.u32 2, %s25
        %s282 = smul.u32 4, %s26
        %s283 = smul.u32 2, %s25
        %s284 = smul.u32 %s26, 16
        %s285 = scalar_lea.vmem %s270, %s284
        %v286 = vld [vmem:[%s285] sm:$0xff]
        %v287 = vld [vmem:[%s285 + $0x8] sm:$0xff]
        %v288 = vld [vmem:[%s285 + $0x10] sm:$0xff]
        %v289 = vld [vmem:[%s275] sm:$0xff]
        %v290 = vld [vmem:[%s275 + $0x8] sm:$0xff]
        %v291 = vld [vmem:[%s275 + $0x10] sm:$0xff]
        %v292 = vld [vmem:[%s275 + $0x18] sm:$0xff]
        %v293 = vld [vmem:[%s275 + $0x20] sm:$0xff]
        %v294 = vld [vmem:[%s275 + $0x28] sm:$0xff]
        %v295 = vld [vmem:[%s275 + $0x30] sm:$0xff]
        %v296 = vld [vmem:[%s275 + $0x38] sm:$0xff]
        %v297 = vld [vmem:[%s275 + $0x40] sm:$0xff]
        %v298 = vld [vmem:[%s275 + $0x48] sm:$0xff]
        %v299 = vld [vmem:[%s275 + $0x50] sm:$0xff]
        %v300 = vld [vmem:[%s275 + $0x58] sm:$0xff]
        %vm301 = vcmask 195584
        %v303 = vsel %vm301, %v289, 0
        %v306 = vsel %vm301, %v290, 0
        %v309 = vsel %vm301, %v291, 0
        %v312 = vsel %vm301, %v292, 0
        %v315 = vsel %vm301, %v293, 0
        %v318 = vsel %vm301, %v294, 0
        %v321 = vsel %vm301, %v295, 0
        %v324 = vsel %vm301, %v296, 0
        %v327 = vsel %vm301, %v297, 0
        %v330 = vsel %vm301, %v298, 0
        %v333 = vsel %vm301, %v299, 0
        %v336 = vsel %vm301, %v300, 0
        %338 = vmatprep.subr.mxu0 0.0
        %339 = vmatpush1.msra.mxu0 %v286
        %340 = vmatprep.subr.mxu0 0.0
        %341 = vmatpush1.msra.mxu0 %v287
        %342 = vmatprep.subr.mxu0 0.0
        %343 = vmatpush1.msra.mxu0 %v288
        %344 = vmatprep.subr.mxu0 0.0
        %345 = vmatpush1.msra.mxu0 0.0
        %346 = vmatprep.subr.mxu0 0.0
        %347 = vmatpush1.msra.mxu0 0.0
        %348 = vmatprep.subr.mxu0 0.0
        %349 = vmatpush1.msra.mxu0 0.0
        %350 = vmatprep.subr.mxu0 0.0
        %351 = vmatpush1.msra.mxu0 0.0
        %352 = vmatprep.subr.mxu0 0.0
        %353 = vmatpush1.msra.mxu0 0.0
        %354 = vmatprep.subr.mxu0 0.0
        %355 = vmatpush1.msra.mxu0 0.0
        %356 = vmatprep.subr.mxu0 0.0
        %357 = vmatpush1.msra.mxu0 0.0
        %358 = vmatprep.subr.mxu0 0.0
        %359 = vmatpush1.msra.mxu0 0.0
        %360 = vmatprep.subr.mxu0 0.0
        %361 = vmatpush1.msra.mxu0 0.0
        %362 = vmatprep.subr.mxu0 0.0
        %363 = vmatpush1.msra.mxu0 0.0
        %364 = vmatprep.subr.mxu0 0.0
        %365 = vmatpush1.msra.mxu0 0.0
        %366 = vmatprep.subr.mxu0 0.0
        %367 = vmatpush1.msra.mxu0 0.0
        %368 = vmatprep.subr.mxu0 0.0
        %369 = vmatpush1.msra.mxu0 0.0
        %370 = vmatprep.subr.mxu0 0.0
        %371 = vmatpush1.msra.mxu0 0.0
        %372 = vmatprep.subr.mxu0 0.0
        %373 = vmatpush1.msra.mxu0 0.0
        %374 = vmatprep.subr.mxu0 0.0
        %375 = vmatpush1.msra.mxu0 0.0
        %376 = vmatprep.subr.mxu0 0.0
        %377 = vmatpush1.msra.mxu0 0.0
        %378 = vmatprep.subr.mxu0 0.0
        %379 = vmatpush1.msra.mxu0 0.0
        %380 = vmatprep.subr.mxu0 0.0
        %381 = vmatpush1.msra.mxu0 0.0
        %382 = vmatprep.subr.mxu0 0.0
        %383 = vmatpush1.msra.mxu0 0.0
        %384 = vmatprep.subr.mxu0 0.0
        %385 = vmatpush1.msra.mxu0 0.0
        %386 = vmatprep.subr.mxu0 0.0
        %387 = vmatpush1.msra.mxu0 0.0
        %388 = vmatprep.subr.mxu0 0.0
        %389 = vmatpush1.msra.mxu0 0.0
        %390 = vmatprep.subr.mxu0 0.0
        %391 = vmatpush1.msra.mxu0 0.0
        %392 = vmatprep.subr.mxu0 0.0
        %393 = vmatpush1.msra.mxu0 0.0
        %394 = vmatprep.subr.mxu0 0.0
        %395 = vmatpush1.msra.mxu0 0.0
        %396 = vmatprep.subr.mxu0 0.0
        %397 = vmatpush1.msra.mxu0 0.0
        %398 = vmatprep.subr.mxu0 0.0
        %399 = vmatpush1.msra.mxu0 0.0
        %400 = vmatprep.subr.mxu0 0.0
        %401 = vmatpush1.msra.mxu0 0.0
        %402 = vmatprep.mubr.f32.mxu0 0.0
        %403 = vmatmul.mubr.f32.gmra.mrb[0].mxu0 %v303
        %v404 = vpop.f32.mrb[0].mxu0
        %v405 = vadd.f32 0.0, %v404
        %v406 = vpop.f32.mrb[0].mxu0
        %407 = vmatprep.mubr.f32.mxu0 0.0
        %408 = vmatmul.mubr.f32.gmra.mrb[0].mxu0 %v306
        %v409 = vpop.f32.mrb[0].mxu0
        %v410 = vadd.f32 0.0, %v409
        %v411 = vpop.f32.mrb[0].mxu0
        %412 = vmatprep.mubr.f32.mxu0 0.0
        %413 = vmatmul.mubr.f32.gmra.mrb[0].mxu0 %v309
        %v414 = vpop.f32.mrb[0].mxu0
        %v415 = vadd.f32 0.0, %v414
        %v416 = vpop.f32.mrb[0].mxu0
        %417 = vmatprep.mubr.f32.mxu0 0.0
        %418 = vmatmul.mubr.f32.gmra.mrb[0].mxu0 %v312
        %v419 = vpop.f32.mrb[0].mxu0
        %v420 = vadd.f32 0.0, %v419
        %v421 = vpop.f32.mrb[0].mxu0
        %422 = vmatprep.mubr.f32.mxu0 0.0
        %423 = vmatmul.mubr.f32.gmra.mrb[0].mxu0 %v315
        %v424 = vpop.f32.mrb[0].mxu0
        %v425 = vadd.f32 0.0, %v424
        %v426 = vpop.f32.mrb[0].mxu0
        %427 = vmatprep.mubr.f32.mxu0 0.0
        %428 = vmatmul.mubr.f32.gmra.mrb[0].mxu0 %v318
        %v429 = vpop.f32.mrb[0].mxu0
        %v430 = vadd.f32 0.0, %v429
        %v431 = vpop.f32.mrb[0].mxu0
        %432 = vmatprep.mubr.f32.mxu0 0.0
        %433 = vmatmul.mubr.f32.gmra.mrb[0].mxu0 %v321
        %v434 = vpop.f32.mrb[0].mxu0
        %v435 = vadd.f32 0.0, %v434
        %v436 = vpop.f32.mrb[0].mxu0
        %437 = vmatprep.mubr.f32.mxu0 0.0
        %438 = vmatmul.mubr.f32.gmra.mrb[0].mxu0 %v324
        %v439 = vpop.f32.mrb[0].mxu0
        %v440 = vadd.f32 0.0, %v439
        %v441 = vpop.f32.mrb[0].mxu0
        %442 = vmatprep.mubr.f32.mxu0 0.0
        %443 = vmatmul.mubr.f32.gmra.mrb[0].mxu0 %v327
        %v444 = vpop.f32.mrb[0].mxu0
        %v445 = vadd.f32 0.0, %v444
        %v446 = vpop.f32.mrb[0].mxu0
        %447 = vmatprep.mubr.f32.mxu0 0.0
        %448 = vmatmul.mubr.f32.gmra.mrb[0].mxu0 %v330
        %v449 = vpop.f32.mrb[0].mxu0
        %v450 = vadd.f32 0.0, %v449
        %v451 = vpop.f32.mrb[0].mxu0
        %452 = vmatprep.mubr.f32.mxu0 0.0
        %453 = vmatmul.mubr.f32.gmra.mrb[0].mxu0 %v333
        %v454 = vpop.f32.mrb[0].mxu0
        %v455 = vadd.f32 0.0, %v454
        %v456 = vpop.f32.mrb[0].mxu0
        %457 = vmatprep.mubr.f32.mxu0 0.0
        %458 = vmatmul.mubr.f32.gmra.mrb[0].mxu0 %v336
        %v459 = vpop.f32.mrb[0].mxu0
        %v460 = vadd.f32 0.0, %v459
        %v461 = vpop.f32.mrb[0].mxu0
        %462 = vdwg.mxu0
        %v463 = vld [vmem:[#allocation3] sm:$0xff]
        %v464 = vld [vmem:[#allocation3 + $0x8] sm:$0xff]
        %v465 = vld [vmem:[#allocation3 + $0x10] sm:$0xff]
        %v466 = vld [vmem:[#allocation3 + $0x18] sm:$0xff]
        %v467 = vld [vmem:[#allocation3 + $0x20] sm:$0xff]
        %v468 = vld [vmem:[#allocation3 + $0x28] sm:$0xff]
        %v469 = vld [vmem:[#allocation3 + $0x30] sm:$0xff]
        %v470 = vld [vmem:[#allocation3 + $0x38] sm:$0xff]
        %v471 = vld [vmem:[#allocation3 + $0x40] sm:$0xff]
        %v472 = vld [vmem:[#allocation3 + $0x48] sm:$0xff]
        %v473 = vld [vmem:[#allocation3 + $0x50] sm:$0xff]
        %v474 = vld [vmem:[#allocation3 + $0x58] sm:$0xff]
        %v475 = vld [vmem:[#allocation3 + $0x60] sm:$0xff]
        %v476 = vld [vmem:[#allocation3 + $0x68] sm:$0xff]
        %v477 = vld [vmem:[#allocation3 + $0x70] sm:$0xff]
        %v478 = vld [vmem:[#allocation3 + $0x78] sm:$0xff]
        %v479 = vld [vmem:[#allocation3 + $0x80] sm:$0xff]
        %v480 = vld [vmem:[#allocation3 + $0x88] sm:$0xff]
        %v481 = vld [vmem:[#allocation3 + $0x90] sm:$0xff]
        %v482 = vld [vmem:[#allocation3 + $0x98] sm:$0xff]
        %v483 = vld [vmem:[#allocation3 + $0xa0] sm:$0xff]
        %v484 = vld [vmem:[#allocation3 + $0xa8] sm:$0xff]
        %v485 = vld [vmem:[#allocation3 + $0xb0] sm:$0xff]
        %v486 = vld [vmem:[#allocation3 + $0xb8] sm:$0xff]
        %v487 = vld [vmem:[#allocation3 + $0xc0] sm:$0xff]
        %v488 = vld [vmem:[#allocation3 + $0xc8] sm:$0xff]
        %v489 = vld [vmem:[#allocation3 + $0xd0] sm:$0xff]
        %v490 = vld [vmem:[#allocation3 + $0xd8] sm:$0xff]
        %v491 = vld [vmem:[#allocation3 + $0xe0] sm:$0xff]
        %v492 = vld [vmem:[#allocation3 + $0xe8] sm:$0xff]
        %v493 = vld [vmem:[#allocation3 + $0xf0] sm:$0xff]
        %v494 = vld [vmem:[#allocation3 + $0xf8] sm:$0xff]
        %495 = vmatprep.subr.mxu0 %v464
        %496 = vmatpush1.msra.mxu0 %v463
        %497 = vmatprep.subr.mxu0 %v466
        %498 = vmatpush1.msra.mxu0 %v465
        %499 = vmatprep.subr.mxu0 %v468
        %500 = vmatpush1.msra.mxu0 %v467
        %501 = vmatprep.subr.mxu0 %v470
        %502 = vmatpush1.msra.mxu0 %v469
        %503 = vmatprep.subr.mxu0 %v472
        %504 = vmatpush1.msra.mxu0 %v471
        %505 = vmatprep.subr.mxu0 %v474
        %506 = vmatpush1.msra.mxu0 %v473
        %507 = vmatprep.subr.mxu0 %v476
        %508 = vmatpush1.msra.mxu0 %v475
        %509 = vmatprep.subr.mxu0 %v478
        %510 = vmatpush1.msra.mxu0 %v477
        %511 = vmatprep.subr.mxu0 %v480
        %512 = vmatpush1.msra.mxu0 %v479
        %513 = vmatprep.subr.mxu0 %v482
        %514 = vmatpush1.msra.mxu0 %v481
        %515 = vmatprep.subr.mxu0 %v484
        %516 = vmatpush1.msra.mxu0 %v483
        %517 = vmatprep.subr.mxu0 %v486
        %518 = vmatpush1.msra.mxu0 %v485
        %519 = vmatprep.subr.mxu0 %v488
        %520 = vmatpush1.msra.mxu0 %v487
        %521 = vmatprep.subr.mxu0 %v490
        %522 = vmatpush1.msra.mxu0 %v489
        %523 = vmatprep.subr.mxu0 %v492
        %524 = vmatpush1.msra.mxu0 %v491
        %525 = vmatprep.subr.mxu0 %v494
        %526 = vmatpush1.msra.mxu0 %v493
        %527 = vmatprep.subr.mxu0 0.0
        %528 = vmatpush1.msra.mxu0 0.0
        %529 = vmatprep.subr.mxu0 0.0
        %530 = vmatpush1.msra.mxu0 0.0
        %531 = vmatprep.subr.mxu0 0.0
        %532 = vmatpush1.msra.mxu0 0.0
        %533 = vmatprep.subr.mxu0 0.0
        %534 = vmatpush1.msra.mxu0 0.0
        %535 = vmatprep.subr.mxu0 0.0
        %536 = vmatpush1.msra.mxu0 0.0
        %537 = vmatprep.subr.mxu0 0.0
        %538 = vmatpush1.msra.mxu0 0.0
        %539 = vmatprep.subr.mxu0 0.0
        %540 = vmatpush1.msra.mxu0 0.0
        %541 = vmatprep.subr.mxu0 0.0
        %542 = vmatpush1.msra.mxu0 0.0
        %543 = vmatprep.subr.mxu0 0.0
        %544 = vmatpush1.msra.mxu0 0.0
        %545 = vmatprep.subr.mxu0 0.0
        %546 = vmatpush1.msra.mxu0 0.0
        %547 = vmatprep.subr.mxu0 0.0
        %548 = vmatpush1.msra.mxu0 0.0
        %549 = vmatprep.subr.mxu0 0.0
        %550 = vmatpush1.msra.mxu0 0.0
        %551 = vmatprep.subr.mxu0 0.0
        %552 = vmatpush1.msra.mxu0 0.0
        %553 = vmatprep.subr.mxu0 0.0
        %554 = vmatpush1.msra.mxu0 0.0
        %555 = vmatprep.subr.mxu0 0.0
        %556 = vmatpush1.msra.mxu0 0.0
        %557 = vmatprep.subr.mxu0 0.0
        %558 = vmatpush1.msra.mxu0 0.0
        %559 = vmatprep.mubr.f32.mxu0 0.0
        %560 = vmatmul.mubr.f32.gmra.mrb[0].mxu0 %v405
        %v561 = vpop.f32.mrb[0].mxu0
        %v562 = vadd.f32 0.0, %v561
        %v563 = vpop.f32.mrb[0].mxu0
        %v564 = vadd.f32 0.0, %v563
        %565 = vmatprep.mubr.f32.mxu0 0.0
        %566 = vmatmul.mubr.f32.gmra.mrb[0].mxu0 %v410
        %v567 = vpop.f32.mrb[0].mxu0
        %v568 = vadd.f32 0.0, %v567
        %v569 = vpop.f32.mrb[0].mxu0
        %v570 = vadd.f32 0.0, %v569
        %571 = vmatprep.mubr.f32.mxu0 0.0
        %572 = vmatmul.mubr.f32.gmra.mrb[0].mxu0 %v415
        %v573 = vpop.f32.mrb[0].mxu0
        %v574 = vadd.f32 0.0, %v573
        %v575 = vpop.f32.mrb[0].mxu0
        %v576 = vadd.f32 0.0, %v575
        %577 = vmatprep.mubr.f32.mxu0 0.0
        %578 = vmatmul.mubr.f32.gmra.mrb[0].mxu0 %v420
        %v579 = vpop.f32.mrb[0].mxu0
        %v580 = vadd.f32 0.0, %v579
        %v581 = vpop.f32.mrb[0].mxu0
        %v582 = vadd.f32 0.0, %v581
        %583 = vdwg.mxu0
        %584 = vst [vmem:[#allocation2] sm:$0xff] %v562
        %585 = vst [vmem:[#allocation2 + $0x8] sm:$0xff] %v564
        %586 = vst [vmem:[#allocation2 + $0x10] sm:$0xff] %v568
        %587 = vst [vmem:[#allocation2 + $0x18] sm:$0xff] %v570
        %588 = vst [vmem:[#allocation2 + $0x20] sm:$0xff] %v574
        %589 = vst [vmem:[#allocation2 + $0x28] sm:$0xff] %v576
        %590 = vst [vmem:[#allocation2 + $0x30] sm:$0xff] %v580
        %591 = vst [vmem:[#allocation2 + $0x38] sm:$0xff] %v582
        %v592 = vld [vmem:[#allocation2] sm:$0xff]
        %v593 = vld [vmem:[#allocation2 + $0x8] sm:$0xff]
        %v594 = vld [vmem:[#allocation2 + $0x10] sm:$0xff]
        %v595 = vld [vmem:[#allocation2 + $0x18] sm:$0xff]
        %v596 = vld [vmem:[#allocation2 + $0x20] sm:$0xff]
        %v597 = vld [vmem:[#allocation2 + $0x28] sm:$0xff]
        %v598 = vld [vmem:[#allocation2 + $0x30] sm:$0xff]
        %v599 = vld [vmem:[#allocation2 + $0x38] sm:$0xff]
        %s600 = scalar_lea.vmem [#allocation3], 256
        %v601 = vld [vmem:[%s600] sm:$0xff]
        %v602 = vld [vmem:[%s600 + $0x8] sm:$0xff]
        %v603 = vld [vmem:[%s600 + $0x10] sm:$0xff]
        %v604 = vld [vmem:[%s600 + $0x18] sm:$0xff]
        %v605 = vld [vmem:[%s600 + $0x20] sm:$0xff]
        %v606 = vld [vmem:[%s600 + $0x28] sm:$0xff]
        %v607 = vld [vmem:[%s600 + $0x30] sm:$0xff]
        %v608 = vld [vmem:[%s600 + $0x38] sm:$0xff]
        %v609 = vld [vmem:[%s600 + $0x40] sm:$0xff]
        %v610 = vld [vmem:[%s600 + $0x48] sm:$0xff]
        %v611 = vld [vmem:[%s600 + $0x50] sm:$0xff]
        %v612 = vld [vmem:[%s600 + $0x58] sm:$0xff]
        %v613 = vld [vmem:[%s600 + $0x60] sm:$0xff]
        %v614 = vld [vmem:[%s600 + $0x68] sm:$0xff]
        %v615 = vld [vmem:[%s600 + $0x70] sm:$0xff]
        %v616 = vld [vmem:[%s600 + $0x78] sm:$0xff]
        %v617 = vld [vmem:[%s600 + $0x80] sm:$0xff]
        %v618 = vld [vmem:[%s600 + $0x88] sm:$0xff]
        %v619 = vld [vmem:[%s600 + $0x90] sm:$0xff]
        %v620 = vld [vmem:[%s600 + $0x98] sm:$0xff]
        %v621 = vld [vmem:[%s600 + $0xa0] sm:$0xff]
        %v622 = vld [vmem:[%s600 + $0xa8] sm:$0xff]
        %v623 = vld [vmem:[%s600 + $0xb0] sm:$0xff]
        %v624 = vld [vmem:[%s600 + $0xb8] sm:$0xff]
        %v625 = vld [vmem:[%s600 + $0xc0] sm:$0xff]
        %v626 = vld [vmem:[%s600 + $0xc8] sm:$0xff]
        %v627 = vld [vmem:[%s600 + $0xd0] sm:$0xff]
        %v628 = vld [vmem:[%s600 + $0xd8] sm:$0xff]
        %v629 = vld [vmem:[%s600 + $0xe0] sm:$0xff]
        %v630 = vld [vmem:[%s600 + $0xe8] sm:$0xff]
        %v631 = vld [vmem:[%s600 + $0xf0] sm:$0xff]
        %v632 = vld [vmem:[%s600 + $0xf8] sm:$0xff]
        %633 = vmatprep.subr.mxu0 %v602
        %634 = vmatpush1.msra.mxu0 %v601
        %635 = vmatprep.subr.mxu0 %v604
        %636 = vmatpush1.msra.mxu0 %v603
        %637 = vmatprep.subr.mxu0 %v606
        %638 = vmatpush1.msra.mxu0 %v605
        %639 = vmatprep.subr.mxu0 %v608
        %640 = vmatpush1.msra.mxu0 %v607
        %641 = vmatprep.subr.mxu0 %v610
        %642 = vmatpush1.msra.mxu0 %v609
        %643 = vmatprep.subr.mxu0 %v612
        %644 = vmatpush1.msra.mxu0 %v611
        %645 = vmatprep.subr.mxu0 %v614
        %646 = vmatpush1.msra.mxu0 %v613
        %647 = vmatprep.subr.mxu0 %v616
        %648 = vmatpush1.msra.mxu0 %v615
        %649 = vmatprep.subr.mxu0 %v618
        %650 = vmatpush1.msra.mxu0 %v617
        %651 = vmatprep.subr.mxu0 %v620
        %652 = vmatpush1.msra.mxu0 %v619
        %653 = vmatprep.subr.mxu0 %v622
        %654 = vmatpush1.msra.mxu0 %v621
        %655 = vmatprep.subr.mxu0 %v624
        %656 = vmatpush1.msra.mxu0 %v623
        %657 = vmatprep.subr.mxu0 %v626
        %658 = vmatpush1.msra.mxu0 %v625
        %659 = vmatprep.subr.mxu0 %v628
        %660 = vmatpush1.msra.mxu0 %v627
        %661 = vmatprep.subr.mxu0 %v630
        %662 = vmatpush1.msra.mxu0 %v629
        %663 = vmatprep.subr.mxu0 %v632
        %664 = vmatpush1.msra.mxu0 %v631
        %665 = vmatprep.subr.mxu0 0.0
        %666 = vmatpush1.msra.mxu0 0.0
        %667 = vmatprep.subr.mxu0 0.0
        %668 = vmatpush1.msra.mxu0 0.0
        %669 = vmatprep.subr.mxu0 0.0
        %670 = vmatpush1.msra.mxu0 0.0
        %671 = vmatprep.subr.mxu0 0.0
        %672 = vmatpush1.msra.mxu0 0.0
        %673 = vmatprep.subr.mxu0 0.0
        %674 = vmatpush1.msra.mxu0 0.0
        %675 = vmatprep.subr.mxu0 0.0
        %676 = vmatpush1.msra.mxu0 0.0
        %677 = vmatprep.subr.mxu0 0.0
        %678 = vmatpush1.msra.mxu0 0.0
        %679 = vmatprep.subr.mxu0 0.0
        %680 = vmatpush1.msra.mxu0 0.0
        %681 = vmatprep.subr.mxu0 0.0
        %682 = vmatpush1.msra.mxu0 0.0
        %683 = vmatprep.subr.mxu0 0.0
        %684 = vmatpush1.msra.mxu0 0.0
        %685 = vmatprep.subr.mxu0 0.0
        %686 = vmatpush1.msra.mxu0 0.0
        %687 = vmatprep.subr.mxu0 0.0
        %688 = vmatpush1.msra.mxu0 0.0
        %689 = vmatprep.subr.mxu0 0.0
        %690 = vmatpush1.msra.mxu0 0.0
        %691 = vmatprep.subr.mxu0 0.0
        %692 = vmatpush1.msra.mxu0 0.0
        %693 = vmatprep.subr.mxu0 0.0
        %694 = vmatpush1.msra.mxu0 0.0
        %695 = vmatprep.subr.mxu0 0.0
        %696 = vmatpush1.msra.mxu0 0.0
        %697 = vmatprep.mubr.f32.mxu0 0.0
        %698 = vmatmul.mubr.f32.gmra.mrb[0].mxu0 %v425
        %v699 = vpop.f32.mrb[0].mxu0
        %v700 = vadd.f32 0.0, %v699
        %v701 = vpop.f32.mrb[0].mxu0
        %v702 = vadd.f32 0.0, %v701
        %703 = vmatprep.mubr.f32.mxu0 0.0
        %704 = vmatmul.mubr.f32.gmra.mrb[0].mxu0 %v430
        %v705 = vpop.f32.mrb[0].mxu0
        %v706 = vadd.f32 0.0, %v705
        %v707 = vpop.f32.mrb[0].mxu0
        %v708 = vadd.f32 0.0, %v707
        %709 = vmatprep.mubr.f32.mxu0 0.0
        %710 = vmatmul.mubr.f32.gmra.mrb[0].mxu0 %v435
        %v711 = vpop.f32.mrb[0].mxu0
        %v712 = vadd.f32 0.0, %v711
        %v713 = vpop.f32.mrb[0].mxu0
        %v714 = vadd.f32 0.0, %v713
        %715 = vmatprep.mubr.f32.mxu0 0.0
        %716 = vmatmul.mubr.f32.gmra.mrb[0].mxu0 %v440
        %v717 = vpop.f32.mrb[0].mxu0
        %v718 = vadd.f32 0.0, %v717
        %v719 = vpop.f32.mrb[0].mxu0
        %v720 = vadd.f32 0.0, %v719
        %721 = vdwg.mxu0
        %v722 = vadd.f32 %v592, %v700
        %v723 = vadd.f32 %v593, %v702
        %v724 = vadd.f32 %v594, %v706
        %v725 = vadd.f32 %v595, %v708
        %v726 = vadd.f32 %v596, %v712
        %v727 = vadd.f32 %v597, %v714
        %v728 = vadd.f32 %v598, %v718
        %v729 = vadd.f32 %v599, %v720
        %730 = vst [vmem:[#allocation2] sm:$0xff] %v722
        %731 = vst [vmem:[#allocation2 + $0x8] sm:$0xff] %v723
        %732 = vst [vmem:[#allocation2 + $0x10] sm:$0xff] %v724
        %733 = vst [vmem:[#allocation2 + $0x18] sm:$0xff] %v725
        %734 = vst [vmem:[#allocation2 + $0x20] sm:$0xff] %v726
        %735 = vst [vmem:[#allocation2 + $0x28] sm:$0xff] %v727
        %736 = vst [vmem:[#allocation2 + $0x30] sm:$0xff] %v728
        %737 = vst [vmem:[#allocation2 + $0x38] sm:$0xff] %v729
        %v738 = vld [vmem:[#allocation2] sm:$0xff]
        %v739 = vld [vmem:[#allocation2 + $0x8] sm:$0xff]
        %v740 = vld [vmem:[#allocation2 + $0x10] sm:$0xff]
        %v741 = vld [vmem:[#allocation2 + $0x18] sm:$0xff]
        %v742 = vld [vmem:[#allocation2 + $0x20] sm:$0xff]
        %v743 = vld [vmem:[#allocation2 + $0x28] sm:$0xff]
        %v744 = vld [vmem:[#allocation2 + $0x30] sm:$0xff]
        %v745 = vld [vmem:[#allocation2 + $0x38] sm:$0xff]
        %s746 = scalar_lea.vmem [#allocation3], 512
        %v747 = vld [vmem:[%s746] sm:$0xff]
        %v748 = vld [vmem:[%s746 + $0x8] sm:$0xff]
        %v749 = vld [vmem:[%s746 + $0x10] sm:$0xff]
        %v750 = vld [vmem:[%s746 + $0x18] sm:$0xff]
        %v751 = vld [vmem:[%s746 + $0x20] sm:$0xff]
        %v752 = vld [vmem:[%s746 + $0x28] sm:$0xff]
        %v753 = vld [vmem:[%s746 + $0x30] sm:$0xff]
        %v754 = vld [vmem:[%s746 + $0x38] sm:$0xff]
        %v755 = vld [vmem:[%s746 + $0x40] sm:$0xff]
        %v756 = vld [vmem:[%s746 + $0x48] sm:$0xff]
        %v757 = vld [vmem:[%s746 + $0x50] sm:$0xff]
        %v758 = vld [vmem:[%s746 + $0x58] sm:$0xff]
        %v759 = vld [vmem:[%s746 + $0x60] sm:$0xff]
        %v760 = vld [vmem:[%s746 + $0x68] sm:$0xff]
        %v761 = vld [vmem:[%s746 + $0x70] sm:$0xff]
        %v762 = vld [vmem:[%s746 + $0x78] sm:$0xff]
        %v763 = vld [vmem:[%s746 + $0x80] sm:$0xff]
        %v764 = vld [vmem:[%s746 + $0x88] sm:$0xff]
        %v765 = vld [vmem:[%s746 + $0x90] sm:$0xff]
        %v766 = vld [vmem:[%s746 + $0x98] sm:$0xff]
        %v767 = vld [vmem:[%s746 + $0xa0] sm:$0xff]
        %v768 = vld [vmem:[%s746 + $0xa8] sm:$0xff]
        %v769 = vld [vmem:[%s746 + $0xb0] sm:$0xff]
        %v770 = vld [vmem:[%s746 + $0xb8] sm:$0xff]
        %v771 = vld [vmem:[%s746 + $0xc0] sm:$0xff]
        %v772 = vld [vmem:[%s746 + $0xc8] sm:$0xff]
        %v773 = vld [vmem:[%s746 + $0xd0] sm:$0xff]
        %v774 = vld [vmem:[%s746 + $0xd8] sm:$0xff]
        %v775 = vld [vmem:[%s746 + $0xe0] sm:$0xff]
        %v776 = vld [vmem:[%s746 + $0xe8] sm:$0xff]
        %v777 = vld [vmem:[%s746 + $0xf0] sm:$0xff]
        %v778 = vld [vmem:[%s746 + $0xf8] sm:$0xff]
        %779 = vmatprep.subr.mxu0 %v748
        %780 = vmatpush1.msra.mxu0 %v747
        %781 = vmatprep.subr.mxu0 %v750
        %782 = vmatpush1.msra.mxu0 %v749
        %783 = vmatprep.subr.mxu0 %v752
        %784 = vmatpush1.msra.mxu0 %v751
        %785 = vmatprep.subr.mxu0 %v754
        %786 = vmatpush1.msra.mxu0 %v753
        %787 = vmatprep.subr.mxu0 %v756
        %788 = vmatpush1.msra.mxu0 %v755
        %789 = vmatprep.subr.mxu0 %v758
        %790 = vmatpush1.msra.mxu0 %v757
        %791 = vmatprep.subr.mxu0 %v760
        %792 = vmatpush1.msra.mxu0 %v759
        %793 = vmatprep.subr.mxu0 %v762
        %794 = vmatpush1.msra.mxu0 %v761
        %795 = vmatprep.subr.mxu0 %v764
        %796 = vmatpush1.msra.mxu0 %v763
        %797 = vmatprep.subr.mxu0 %v766
        %798 = vmatpush1.msra.mxu0 %v765
        %799 = vmatprep.subr.mxu0 %v768
        %800 = vmatpush1.msra.mxu0 %v767
        %801 = vmatprep.subr.mxu0 %v770
        %802 = vmatpush1.msra.mxu0 %v769
        %803 = vmatprep.subr.mxu0 %v772
        %804 = vmatpush1.msra.mxu0 %v771
        %805 = vmatprep.subr.mxu0 %v774
        %806 = vmatpush1.msra.mxu0 %v773
        %807 = vmatprep.subr.mxu0 %v776
        %808 = vmatpush1.msra.mxu0 %v775
        %809 = vmatprep.subr.mxu0 %v778
        %810 = vmatpush1.msra.mxu0 %v777
        %811 = vmatprep.subr.mxu0 0.0
        %812 = vmatpush1.msra.mxu0 0.0
        %813 = vmatprep.subr.mxu0 0.0
        %814 = vmatpush1.msra.mxu0 0.0
        %815 = vmatprep.subr.mxu0 0.0
        %816 = vmatpush1.msra.mxu0 0.0
        %817 = vmatprep.subr.mxu0 0.0
        %818 = vmatpush1.msra.mxu0 0.0
        %819 = vmatprep.subr.mxu0 0.0
        %820 = vmatpush1.msra.mxu0 0.0
        %821 = vmatprep.subr.mxu0 0.0
        %822 = vmatpush1.msra.mxu0 0.0
        %823 = vmatprep.subr.mxu0 0.0
        %824 = vmatpush1.msra.mxu0 0.0
        %825 = vmatprep.subr.mxu0 0.0
        %826 = vmatpush1.msra.mxu0 0.0
        %827 = vmatprep.subr.mxu0 0.0
        %828 = vmatpush1.msra.mxu0 0.0
        %829 = vmatprep.subr.mxu0 0.0
        %830 = vmatpush1.msra.mxu0 0.0
        %831 = vmatprep.subr.mxu0 0.0
        %832 = vmatpush1.msra.mxu0 0.0
        %833 = vmatprep.subr.mxu0 0.0
        %834 = vmatpush1.msra.mxu0 0.0
        %835 = vmatprep.subr.mxu0 0.0
        %836 = vmatpush1.msra.mxu0 0.0
        %837 = vmatprep.subr.mxu0 0.0
        %838 = vmatpush1.msra.mxu0 0.0
        %839 = vmatprep.subr.mxu0 0.0
        %840 = vmatpush1.msra.mxu0 0.0
        %841 = vmatprep.subr.mxu0 0.0
        %842 = vmatpush1.msra.mxu0 0.0
        %843 = vmatprep.mubr.f32.mxu0 0.0
        %844 = vmatmul.mubr.f32.gmra.mrb[0].mxu0 %v445
        %v845 = vpop.f32.mrb[0].mxu0
        %v846 = vadd.f32 0.0, %v845
        %v847 = vpop.f32.mrb[0].mxu0
        %v848 = vadd.f32 0.0, %v847
        %849 = vmatprep.mubr.f32.mxu0 0.0
        %850 = vmatmul.mubr.f32.gmra.mrb[0].mxu0 %v450
        %v851 = vpop.f32.mrb[0].mxu0
        %v852 = vadd.f32 0.0, %v851
        %v853 = vpop.f32.mrb[0].mxu0
        %v854 = vadd.f32 0.0, %v853
        %855 = vmatprep.mubr.f32.mxu0 0.0
        %856 = vmatmul.mubr.f32.gmra.mrb[0].mxu0 %v455
        %v857 = vpop.f32.mrb[0].mxu0
        %v858 = vadd.f32 0.0, %v857
        %v859 = vpop.f32.mrb[0].mxu0
        %v860 = vadd.f32 0.0, %v859
        %861 = vmatprep.mubr.f32.mxu0 0.0
        %862 = vmatmul.mubr.f32.gmra.mrb[0].mxu0 %v460
        %v863 = vpop.f32.mrb[0].mxu0
        %v864 = vadd.f32 0.0, %v863
        %v865 = vpop.f32.mrb[0].mxu0
        %v866 = vadd.f32 0.0, %v865
        %867 = vdwg.mxu0
        %v868 = vadd.f32 %v738, %v846
        %v869 = vadd.f32 %v739, %v848
        %v870 = vadd.f32 %v740, %v852
        %v871 = vadd.f32 %v741, %v854
        %v872 = vadd.f32 %v742, %v858
        %v873 = vadd.f32 %v743, %v860
        %v874 = vadd.f32 %v744, %v864
        %v875 = vadd.f32 %v745, %v866
        %876 = vst [vmem:[#allocation2] sm:$0xff] %v868
        %877 = vst [vmem:[#allocation2 + $0x8] sm:$0xff] %v869
        %878 = vst [vmem:[#allocation2 + $0x10] sm:$0xff] %v870
        %879 = vst [vmem:[#allocation2 + $0x18] sm:$0xff] %v871
        %880 = vst [vmem:[#allocation2 + $0x20] sm:$0xff] %v872
        %881 = vst [vmem:[#allocation2 + $0x28] sm:$0xff] %v873
        %882 = vst [vmem:[#allocation2 + $0x30] sm:$0xff] %v874
        %883 = vst [vmem:[#allocation2 + $0x38] sm:$0xff] %v875
        %v884 = vld [vmem:[#allocation2] sm:$0xff]
        %v885 = vld [vmem:[#allocation2 + $0x8] sm:$0xff]
        %v886 = vld [vmem:[#allocation2 + $0x10] sm:$0xff]
        %v887 = vld [vmem:[#allocation2 + $0x18] sm:$0xff]
        %v888 = vld [vmem:[#allocation2 + $0x20] sm:$0xff]
        %v889 = vld [vmem:[#allocation2 + $0x28] sm:$0xff]
        %v890 = vld [vmem:[#allocation2 + $0x30] sm:$0xff]
        %v891 = vld [vmem:[#allocation2 + $0x38] sm:$0xff]
        %v892 = vld [vmem:[%s280] sm:$0x3]
        %v894 = vlaneseq
        %v895 = vshrl.u32 %v894, 7
        %v896 = vsub.s32 0, %v895
        %v897 = vrot.slane %v892, %v896
        %v898 = vlaneseq
        %v899 = vshrl.u32 %v898, 7
        %v900 = vsub.s32 1, %v899
        %v901 = vrot.slane %v892, %v900
        %v904 = vadd.f32 %v884, %v897
        %v905 = vadd.f32 %v885, %v901
        %v906 = vadd.f32 %v886, %v897
        %v907 = vadd.f32 %v887, %v901
        %v908 = vadd.f32 %v888, %v897
        %v909 = vadd.f32 %v889, %v901
        %v910 = vadd.f32 %v890, %v897
        %v911 = vadd.f32 %v891, %v901
        %v912 = vmax.f32 %v904, 0.0
        %v913 = vmax.f32 %v905, 0.0
        %v914 = vmax.f32 %v906, 0.0
        %v915 = vmax.f32 %v907, 0.0
        %v916 = vmax.f32 %v908, 0.0
        %v917 = vmax.f32 %v909, 0.0
        %v918 = vmax.f32 %v910, 0.0
        %v919 = vmax.f32 %v911, 0.0
        %920 = vst [vmem:[%s265] sm:$0xff] %v912
        %921 = vst [vmem:[%s265 + $0x8] sm:$0xff] %v913
        %922 = vst [vmem:[%s265 + $0x10] sm:$0xff] %v914
        %923 = vst [vmem:[%s265 + $0x18] sm:$0xff] %v915
        %924 = vst [vmem:[%s265 + $0x20] sm:$0xff] %v916
        %925 = vst [vmem:[%s265 + $0x28] sm:$0xff] %v917
        %926 = vst [vmem:[%s265 + $0x30] sm:$0xff] %v918
        %927 = vst [vmem:[%s265 + $0x38] sm:$0xff] %v919
        %s928 = sand.u32 %s154, 1
        %s929 = scalar_lea.sflag [#allocation5], %s928
        %s930 = sand.u32 %s154, 1
        %s931 = smul.addr %s930, 64
        %s932 = scalar_lea.vmem [#allocation6], %s931
        // Predicated region
        $region41: #{tpu_custom_call.1} parent=35 // pred_check
          %p933 = pneg %p164
        $region42: #{tpu_custom_call.1} parent=35 // pred_check_branch
          %935 = sbr.rel (%p933) target = $region44
        $region43: #{tpu_custom_call.1} parent=35 // pred_region
          %s936 = smul.u32 4, %s26
          %s937 = smul.u32 2, %s25
          %s939 = ssub.s32 1024, 1024
          %940 = vsyncadd %s929, %s939
          %s941 = smul.addr %s936, 2
          %s942 = sadd.s32 %s937, %s941
          %s943 = smul.addr %s24, 8
          %s944 = sadd.s32 %s942, %s943
          %s945 = smul.addr %s944, 128
          %s946 = scalar_lea.hbm %s4, %s945
          %s947 = sshll.u32 %s932, 4
          %s948 = int_to_ptr.vmem [resolvable:$true] %s947
          %953 = dma.vmem_to_hbm [thread:$0]  %s948, 1024, %s946, %s929, 256, 256, 16
        $region44: #{tpu_custom_call.1} parent=35 // pred_fallthru
          _
      $region36: #{tpu_custom_call.1} parent=5 // pred_fallthru
        _
      %p954 = scmp.le.s32.totalorder 2, %s14
      // Predicated region
      $region45: #{tpu_custom_call.1} parent=5 // pred_check
        %p955 = pneg %p954
      $region46: #{tpu_custom_call.1} parent=5 // pred_check_branch
        %957 = sbr.rel (%p955) target = $region48
      $region47: #{tpu_custom_call.1} parent=5 // pred_region
        %s958 = ssub.s32 %s14, 2
        // Predicated region
        $region49: #{tpu_custom_call.1} parent=47 // pred_check
          %p959 = pneg %p170
        $region50: #{tpu_custom_call.1} parent=47 // pred_check_branch
          %961 = sbr.rel (%p959) target = $region52
        $region51: #{tpu_custom_call.1} parent=47 // pred_region
          %s962 = sand.u32 %s155, 1
          %s963 = scalar_lea.sflag [#allocation5], %s962
          %s964 = sand.u32 %s155, 1
          %s965 = smul.addr %s964, 64
          %s966 = scalar_lea.vmem [#allocation6], %s965
          %967 = dma.done %s963, 1024
        $region52: #{tpu_custom_call.1} parent=47 // pred_fallthru
          _
      $region48: #{tpu_custom_call.1} parent=5 // pred_fallthru
        _
    $region6: #{tpu_custom_call.1} parent=1 // loop_footer
      %s18 = sadd.s32 1, %s14
    $region7: #{tpu_custom_call.1} parent=1 // loop_footer_branch
      %13 = sbr.rel target = $region3
    $region8: #{tpu_custom_call.1} parent=1 // loop_exit
      _
    %968 = vsyncpa [#allocation4], 1
    %s969 = scalar_lea.sflag [#allocation4], 1
    %970 = vsyncpa %s969, 1
    %971 = vsyncpa [#allocation5], 1
    %s972 = scalar_lea.sflag [#allocation5], 1
    %973 = vsyncpa %s972, 1

</llo_original>
